<compile_context>
chip_gen: v7x
topology: tpu7x:2x2x1
jax: 0.10.0
libtpu: 0.0.40
codegen_flags: <defaults>
</compile_context>

<pallas_src>
import functools

import jax
import jax.numpy as jnp
from jax.experimental import pallas as pl
from jax.experimental.pallas import tpu as pltpu


def _mlp_kernel(x_ref, wfc_ref, bfc_ref, wproj_ref, bproj_ref, o_ref, acc_ref):
    # x_ref:     (tm, E)   input row tile
    # wfc_ref:   (E, th)   chunk of fc weight (pre-transposed)
    # bfc_ref:   (1, th)   chunk of fc bias
    # wproj_ref: (th, E)   chunk of proj weight (pre-transposed)
    # bproj_ref: (1, E)    proj bias
    # o_ref:     (tm, E)   output tile (resident across the hidden-chunk axis)
    # acc_ref:   (tm, E)   f32 accumulator scratch
    j = pl.program_id(1)

    @pl.when(j == 0)
    def _():
        acc_ref[...] = jnp.zeros_like(acc_ref)

    # c_fc on this hidden chunk: MXU matmul, native operand dtype, f32 accum.
    x = x_ref[...]
    h = jnp.dot(x, wfc_ref[...], preferred_element_type=jnp.float32)
    h = h + bfc_ref[...].astype(jnp.float32)

    # GELU(approximate='tanh'): 0.5*h*(1 + tanh(sqrt(2/pi)*(h + 0.044715*h^3)))
    # tanh runs on the EUP slot; the surrounding muls overlap under MXU cadence.
    c = 0.7978845608028654  # sqrt(2/pi)
    h = 0.5 * h * (1.0 + jnp.tanh(c * h * (1.0 + 0.044715 * h * h)))

    # c_proj partial product for this chunk, accumulated into f32 scratch.
    acc_ref[...] += jnp.dot(
        h.astype(wproj_ref.dtype), wproj_ref[...],
        preferred_element_type=jnp.float32,
    )

    @pl.when(j == pl.num_programs(1) - 1)
    def _():
        o_ref[...] = (
            acc_ref[...] + bproj_ref[...].astype(jnp.float32)
        ).astype(o_ref.dtype)


def _round_up(n, m):
    return ((n + m - 1) // m) * m


def _pick_tm(M, target=256):
    # Row tile: multiple of 8 sublanes, at most `target`.
    return min(_round_up(max(M, 1), 8), target)


def _pick_th(H, target=512):
    # Hidden chunk: whole H if small, else the largest multiple of 128 that
    # divides H and is <= target (keeps weight-chunk lanes dense).
    if H <= target:
        return H
    cand = (target // 128) * 128
    while cand >= 128:
        if H % cand == 0:
            return cand
        cand -= 128
    return H


@functools.partial(jax.jit, static_argnames=("tm", "th"))
def mlp_forward(x, w_fc, b_fc, w_proj, b_proj, *, tm=None, th=None):
    """x: (B, T, n_embd). Weights are (in, out) layout (already transposed)."""
    B, T, E = x.shape
    H = w_fc.shape[1]  # 4 * n_embd
    M = B * T

    if tm is None:
        tm = _pick_tm(M)
    if th is None:
        th = _pick_th(H)

    # Pad rows so the grid covers every token (no silently dropped tail).
    M_pad = _round_up(M, tm)
    x2d = x.reshape(M, E)
    if M_pad != M:
        x2d = jnp.pad(x2d, ((0, M_pad - M), (0, 0)))

    b_fc2 = b_fc.reshape(1, H)
    b_proj2 = b_proj.reshape(1, E)

    n_row = M_pad // tm
    n_h = H // th

    itemsize = int(jnp.dtype(x.dtype).itemsize)
    w_itemsize = int(jnp.dtype(w_fc.dtype).itemsize)
    cost = pl.CostEstimate(
        flops=4 * M_pad * E * H,                       # two matmuls
        transcendentals=M_pad * H,                     # tanh per hidden unit
        bytes_accessed=(
            M_pad * E * itemsize                       # read x
            + n_row * (E * H + H + H * E) * w_itemsize  # stream weights per row tile
            + E * w_itemsize                           # proj bias
            + M_pad * E * itemsize                     # write y
        ),
    )

    out2d = pl.pallas_call(
        _mlp_kernel,
        out_shape=jax.ShapeDtypeStruct((M_pad, E), x.dtype),
        grid_spec=pltpu.PrefetchScalarGridSpec(
            num_scalar_prefetch=0,
            grid=(n_row, n_h),  # reduction (hidden-chunk) axis last
            in_specs=[
                pl.BlockSpec((tm, E), lambda i, j: (i, 0)),    # x row tile
                pl.BlockSpec((E, th), lambda i, j: (0, j)),    # W_fc chunk (streamed)
                pl.BlockSpec((1, th), lambda i, j: (0, j)),    # b_fc chunk
                pl.BlockSpec((th, E), lambda i, j: (j, 0)),    # W_proj chunk (streamed)
                pl.BlockSpec((1, E), lambda i, j: (0, 0)),     # b_proj (tiny, resident)
            ],
            out_specs=pl.BlockSpec((tm, E), lambda i, j: (i, 0)),
            scratch_shapes=[pltpu.VMEM((tm, E), jnp.float32)],  # f32 accumulator
        ),
        compiler_params=pltpu.CompilerParams(
            dimension_semantics=("parallel", "arbitrary"),
            # Above the 16/32 MiB scoped defaults, below v7x's 64 MiB physical.
            vmem_limit_bytes=48 * 1024 * 1024,
        ),
        cost_estimate=cost,
    )(x2d, w_fc, b_fc2, w_proj, b_proj2)

    if M_pad != M:
        out2d = out2d[:M]
    return out2d.reshape(B, T, E)


def _gelu_tanh_ref(x):
    c = 0.7978845608028654
    return 0.5 * x * (1.0 + jnp.tanh(c * (x + 0.044715 * x ** 3)))


def _ref(x, w_fc, b_fc, w_proj, b_proj):
    return _gelu_tanh_ref(x @ w_fc + b_fc) @ w_proj + b_proj


if __name__ == "__main__":
    key = jax.random.PRNGKey(0)

    # --- Test 1: small GPT-ish shapes (batch=2, seq=8, n_embd=32, hidden=128).
    B, T, E = 2, 8, 32
    H = 4 * E
    kx, kwf, kbf, kwp, kbp = jax.random.split(key, 5)
    x = jax.random.normal(kx, (B, T, E), dtype=jnp.float32)
    w_fc = jax.random.normal(kwf, (E, H), dtype=jnp.float32) * 0.02
    b_fc = jax.random.normal(kbf, (H,), dtype=jnp.float32) * 0.02
    w_proj = jax.random.normal(kwp, (H, E), dtype=jnp.float32) * 0.02
    b_proj = jax.random.normal(kbp, (E,), dtype=jnp.float32) * 0.02

    y = jax.block_until_ready(mlp_forward(x, w_fc, b_fc, w_proj, b_proj))
    y_ref = _ref(x, w_fc, b_fc, w_proj, b_proj)
    assert y.shape == (B, T, E)
    assert jnp.allclose(y, y_ref, atol=1e-4, rtol=1e-4), "mismatch (test 1)"

    # --- Test 2: exercises row padding (M=120 -> 128), multiple row tiles and
    # multiple hidden chunks with the f32 accumulator path.
    B2, T2, E2 = 2, 60, 128
    H2 = 4 * E2
    k2 = jax.random.split(jax.random.PRNGKey(0), 5)
    x2 = jax.random.normal(k2[0], (B2, T2, E2), dtype=jnp.float32)
    w_fc2 = jax.random.normal(k2[1], (E2, H2), dtype=jnp.float32) * 0.02
    b_fc2 = jax.random.normal(k2[2], (H2,), dtype=jnp.float32) * 0.02
    w_proj2 = jax.random.normal(k2[3], (H2, E2), dtype=jnp.float32) * 0.02
    b_proj2 = jax.random.normal(k2[4], (E2,), dtype=jnp.float32) * 0.02

    y2 = jax.block_until_ready(
        mlp_forward(x2, w_fc2, b_fc2, w_proj2, b_proj2, tm=64, th=128)
    )
    y2_ref = _ref(x2, w_fc2, b_fc2, w_proj2, b_proj2)
    assert y2.shape == (B2, T2, E2)
    assert jnp.allclose(y2, y2_ref, atol=1e-4, rtol=1e-4), "mismatch (test 2)"

    print("KERNEL_OK")
</pallas_src>

<mosaic_0001>
module attributes {stable_mosaic.version = 11 : i64} {
  func.func @_mlp_kernel(%arg0: i32, %arg1: i32, %arg2: memref<16x32xf32, #tpu.memory_space<vmem>>, %arg3: memref<32x128xf32, #tpu.memory_space<vmem>>, %arg4: memref<1x128xf32, #tpu.memory_space<vmem>>, %arg5: memref<128x32xf32, #tpu.memory_space<vmem>>, %arg6: memref<1x32xf32, #tpu.memory_space<vmem>>, %arg7: memref<16x32xf32, #tpu.memory_space<vmem>>, %arg8: memref<16x32xf32, #tpu.memory_space<vmem>>) attributes {dimension_semantics = [#tpu.dimension_semantics<parallel>, #tpu.dimension_semantics<arbitrary>], iteration_bounds = array<i64: 1, 1>, scalar_prefetch = 0 : i64, scratch_operands = 1 : i64, tpu.core_type = #tpu.core_type<tc>, window_params = [{transform_indices = @transform_0, window_bounds = array<i64: 16, 32>}, {transform_indices = @transform_1, window_bounds = array<i64: 32, 128>}, {transform_indices = @transform_2, window_bounds = array<i64: 1, 128>}, {transform_indices = @transform_3, window_bounds = array<i64: 128, 32>}, {pipeline_mode = #tpu.pipeline_mode<synchronous>, transform_indices = @transform_4, window_bounds = array<i64: 1, 32>}, {transform_indices = @transform_5, window_bounds = array<i64: 16, 32>}]} {
    %c0_i32 = arith.constant 0 : i32
    %0 = arith.cmpi eq, %arg1, %c0_i32 : i32
    %1 = arith.extui %0 : i1 to i32
    %c0_i32_0 = arith.constant 0 : i32
    %2 = arith.cmpi ne, %1, %c0_i32_0 : i32
    scf.if %2 {
      %cst_20 = arith.constant 0.000000e+00 : f32
      %31 = vector.broadcast %cst_20 : f32 to vector<16x32xf32>
      %c0_21 = arith.constant 0 : index
      %c0_22 = arith.constant 0 : index
      %32 = vector.load %arg8[%c0_21, %c0_22] : memref<16x32xf32, #tpu.memory_space<vmem>>, vector<16x32xf32>
      tpu.vector_store %arg8[%c0_21, %c0_22], %31 {strides = array<i32>} : memref<16x32xf32, #tpu.memory_space<vmem>>, vector<16x32xf32>,
    } else {
    }
    %c0 = arith.constant 0 : index
    %c0_1 = arith.constant 0 : index
    %3 = vector.load %arg2[%c0, %c0_1] : memref<16x32xf32, #tpu.memory_space<vmem>>, vector<16x32xf32>
    %c0_2 = arith.constant 0 : index
    %c0_3 = arith.constant 0 : index
    %4 = vector.load %arg3[%c0_2, %c0_3] : memref<32x128xf32, #tpu.memory_space<vmem>>, vector<32x128xf32>
    %cst = arith.constant dense<0.000000e+00> : vector<16x128xf32>
    %5 = tpu.matmul %3, %4, %cst {dimension_numbers = #tpu.dot_dimension_numbers<[1], [0], [0], [1], [0, 0, 1, 1], [], []>} : vector<16x32xf32>, vector<32x128xf32>, vector<16x128xf32> -> vector<16x128xf32>
    %c0_4 = arith.constant 0 : index
    %c0_5 = arith.constant 0 : index
    %6 = vector.load %arg4[%c0_4, %c0_5] : memref<1x128xf32, #tpu.memory_space<vmem>>, vector<1x128xf32>
    %7 = vector.broadcast %6 : vector<1x128xf32> to vector<16x128xf32>
    %8 = arith.addf %5, %7 : vector<16x128xf32>
    %cst_6 = arith.constant 5.000000e-01 : f32
    %9 = vector.broadcast %cst_6 : f32 to vector<16x128xf32>
    %10 = arith.mulf %9, %8 : vector<16x128xf32>
    %cst_7 = arith.constant 0.797884583 : f32
    %11 = vector.broadcast %cst_7 : f32 to vector<16x128xf32>
    %12 = arith.mulf %11, %8 : vector<16x128xf32>
    %cst_8 = arith.constant 4.471500e-02 : f32
    %13 = vector.broadcast %cst_8 : f32 to vector<16x128xf32>
    %14 = arith.mulf %13, %8 : vector<16x128xf32>
    %15 = arith.mulf %14, %8 : vector<16x128xf32>
    %cst_9 = arith.constant 1.000000e+00 : f32
    %16 = vector.broadcast %cst_9 : f32 to vector<16x128xf32>
    %17 = arith.addf %16, %15 : vector<16x128xf32>
    %18 = arith.mulf %12, %17 : vector<16x128xf32>
    %19 = math.tanh %18 : vector<16x128xf32>
    %cst_10 = arith.constant 1.000000e+00 : f32
    %20 = vector.broadcast %cst_10 : f32 to vector<16x128xf32>
    %21 = arith.addf %20, %19 : vector<16x128xf32>
    %22 = arith.mulf %10, %21 : vector<16x128xf32>
    %c0_11 = arith.constant 0 : index
    %c0_12 = arith.constant 0 : index
    %23 = vector.load %arg8[%c0_11, %c0_12] : memref<16x32xf32, #tpu.memory_space<vmem>>, vector<16x32xf32>
    %c0_13 = arith.constant 0 : index
    %c0_14 = arith.constant 0 : index
    %24 = vector.load %arg5[%c0_13, %c0_14] : memref<128x32xf32, #tpu.memory_space<vmem>>, vector<128x32xf32>
    %cst_15 = arith.constant dense<0.000000e+00> : vector<16x32xf32>
    %25 = tpu.matmul %22, %24, %cst_15 {dimension_numbers = #tpu.dot_dimension_numbers<[1], [0], [0], [1], [0, 0, 1, 1], [], []>} : vector<16x128xf32>, vector<128x32xf32>, vector<16x32xf32> -> vector<16x32xf32>
    %26 = arith.addf %23, %25 : vector<16x32xf32>
    %c0_16 = arith.constant 0 : index
    %c0_17 = arith.constant 0 : index
    %27 = vector.load %arg8[%c0_16, %c0_17] : memref<16x32xf32, #tpu.memory_space<vmem>>, vector<16x32xf32>
    tpu.vector_store %arg8[%c0_16, %c0_17], %26 {strides = array<i32>} : memref<16x32xf32, #tpu.memory_space<vmem>>, vector<16x32xf32>,
    %c0_i32_18 = arith.constant 0 : i32
    %28 = arith.cmpi eq, %arg1, %c0_i32_18 : i32
    %29 = arith.extui %28 : i1 to i32
    %c0_i32_19 = arith.constant 0 : i32
    %30 = arith.cmpi ne, %29, %c0_i32_19 : i32
    scf.if %30 {
      %c0_20 = arith.constant 0 : index
      %c0_21 = arith.constant 0 : index
      %31 = vector.load %arg8[%c0_20, %c0_21] : memref<16x32xf32, #tpu.memory_space<vmem>>, vector<16x32xf32>
      %c0_22 = arith.constant 0 : index
      %c0_23 = arith.constant 0 : index
      %32 = vector.load %arg6[%c0_22, %c0_23] : memref<1x32xf32, #tpu.memory_space<vmem>>, vector<1x32xf32>
      %33 = vector.broadcast %32 : vector<1x32xf32> to vector<16x32xf32>
      %34 = arith.addf %31, %33 : vector<16x32xf32>
      %c0_24 = arith.constant 0 : index
      %c0_25 = arith.constant 0 : index
      %35 = vector.load %arg7[%c0_24, %c0_25] : memref<16x32xf32, #tpu.memory_space<vmem>>, vector<16x32xf32>
      tpu.vector_store %arg7[%c0_24, %c0_25], %34 {strides = array<i32>} : memref<16x32xf32, #tpu.memory_space<vmem>>, vector<16x32xf32>,
    } else {
    }
    return
  }
  func.func @transform_0(%arg0: i32, %arg1: i32) -> (i32, i32) {
    %c0_i32 = arith.constant 0 : i32
    %c0_i32_0 = arith.constant 0 : i32
    return %arg0, %c0_i32 : i32, i32
  }
  func.func @transform_1(%arg0: i32, %arg1: i32) -> (i32, i32) {
    %c0_i32 = arith.constant 0 : i32
    %c0_i32_0 = arith.constant 0 : i32
    return %c0_i32, %arg1 : i32, i32
  }
  func.func @transform_2(%arg0: i32, %arg1: i32) -> (i32, i32) {
    %c0_i32 = arith.constant 0 : i32
    %c0_i32_0 = arith.constant 0 : i32
    return %c0_i32, %arg1 : i32, i32
  }
  func.func @transform_3(%arg0: i32, %arg1: i32) -> (i32, i32) {
    %c0_i32 = arith.constant 0 : i32
    %c0_i32_0 = arith.constant 0 : i32
    return %arg1, %c0_i32 : i32, i32
  }
  func.func @transform_4(%arg0: i32, %arg1: i32) -> (i32, i32) {
    %c0_i32 = arith.constant 0 : i32
    %c0_i32_0 = arith.constant 0 : i32
    %c0_i32_1 = arith.constant 0 : i32
    return %c0_i32, %c0_i32_0 : i32, i32
  }
  func.func @transform_5(%arg0: i32, %arg1: i32) -> (i32, i32) {
    %c0_i32 = arith.constant 0 : i32
    %c0_i32_0 = arith.constant 0 : i32
    return %arg0, %c0_i32 : i32, i32
  }
}

</mosaic_0001>

<llo_original>
// kernel: mlp_forward.1
$region0: #{mlp_forward.1}
  #allocation0 [shape = 'u32[]', space=smem, size = 0x4, offset = 0x4, fixed_abs, tag = 'smem constant byte address 0x4 - core index']
  #allocation1 [shape = 'u32[144,128]{1,0:T(1,128)}', space=vmem, size = 0x12000, scoped, tag = 'internal scratch']
  #allocation2 [shape = 'f32[16,32]{1,0:T(8,128)}', space=vmem, size = 0x2000, scoped, tag = 'scratch operand']
  %s0 = inlined_call_operand.vmem [shape: f32[16,32], index: 0, kind: input, shape index: {}]
  %s1 = inlined_call_operand.vmem [shape: f32[32,128], index: 1, kind: input, shape index: {}]
  %s2 = inlined_call_operand.vmem [shape: f32[1,128], index: 2, kind: input, shape index: {}]
  %s3 = inlined_call_operand.vmem [shape: f32[128,32], index: 3, kind: input, shape index: {}]
  %s4 = inlined_call_operand.vmem [shape: f32[1,32], index: 4, kind: input, shape index: {}]
  %s5 = inlined_call_operand.hbm [shape: f32[16,32], index: 5, kind: output, shape index: {}]
  %s6 = sld [smem:[#allocation0]]
  $region38: #{mlp_forward.1} parent=0
    _
  %s8 = ssub.s32 1, %s6
  %s9 = scalar_select 0, %s8, %s6
  $region1: #{mlp_forward.1} parent=0
    #allocation3 [shape = 'u8[8192]{0}', space=vmem, size = 0x2000, scoped, tag = 'output window, operand 0, single buffered']
    #allocation4 [shape = 's32[1]{0}', space=sflag, size = 0x4, scoped, tag = 'scoped memory for mlp_forward.1']
    %10 = vsyncpa [#allocation4], 0
    // Predicated region
    $region2: #{mlp_forward.1} parent=1 // pred_check
      _
    $region3: #{mlp_forward.1} parent=1 // pred_check_branch
      %12 = sbr.rel (0) target = $region5
    $region4: #{mlp_forward.1} parent=1 // pred_region
      _
    $region5: #{mlp_forward.1} parent=1 // pred_fallthru
      _
    // Predicated region
    $region6: #{mlp_forward.1} parent=1 // pred_check
      _
    $region7: #{mlp_forward.1} parent=1 // pred_check_branch
      %14 = sbr.rel (0) target = $region9
    $region8: #{mlp_forward.1} parent=1 // pred_region
      _
    $region9: #{mlp_forward.1} parent=1 // pred_fallthru
      _
    // Predicated region
    $region10: #{mlp_forward.1} parent=1 // pred_check
      _
    $region11: #{mlp_forward.1} parent=1 // pred_check_branch
      %16 = sbr.rel (0) target = $region13
    $region12: #{mlp_forward.1} parent=1 // pred_region
      _
    $region13: #{mlp_forward.1} parent=1 // pred_fallthru
      _
    // Predicated region
    $region14: #{mlp_forward.1} parent=1 // pred_check
      _
    $region15: #{mlp_forward.1} parent=1 // pred_check_branch
      %18 = sbr.rel (0) target = $region17
    $region16: #{mlp_forward.1} parent=1 // pred_region
      _
    $region17: #{mlp_forward.1} parent=1 // pred_fallthru
      _
    // Predicated region
    $region18: #{mlp_forward.1} parent=1 // pred_check
      _
    $region19: #{mlp_forward.1} parent=1 // pred_check_branch
      %20 = sbr.rel (0) target = $region21
    $region20: #{mlp_forward.1} parent=1 // pred_region
      _
    $region21: #{mlp_forward.1} parent=1 // pred_fallthru
      _
    %p21 = scmp.eq.s32.totalorder 0, 0
    // Predicated region
    $region22: #{mlp_forward.1} parent=1 // pred_check
      %p22 = pneg %p21
    $region23: #{mlp_forward.1} parent=1 // pred_check_branch
      %24 = sbr.rel (%p22) target = $region25
    $region24: #{mlp_forward.1} parent=1 // pred_region
      %vm25 = vcmask 261120
      %26 = vst.msk [vmem:[#allocation2] sm:$0xff] %vm25, 0.0
      %27 = vst.msk [vmem:[#allocation2 + $0x8] sm:$0xff] %vm25, 0.0
    $region25: #{mlp_forward.1} parent=1 // pred_fallthru
      _
    %v28 = vld [vmem:[%s0] sm:$0xff]
    %v29 = vld [vmem:[%s0 + $0x8] sm:$0xff]
    %v30 = vld [vmem:[%s1] sm:$0xff]
    %v31 = vld [vmem:[%s1 + $0x8] sm:$0xff]
    %v32 = vld [vmem:[%s1 + $0x10] sm:$0xff]
    %v33 = vld [vmem:[%s1 + $0x18] sm:$0xff]
    %v34 = vld [vmem:[%s2] sm:$0x1]
    %v36 = vlaneseq
    %v37 = vshrl.u32 %v36, 7
    %v38 = vsub.s32 0, %v37
    %v39 = vrot.slane %v34, %v38
    %vm41 = vcmask 261120
    %v43 = vsel %vm41, %v28, 0
    %v46 = vsel %vm41, %v29, 0
    %48 = vmatprep.subr.mxu0 0.0
    %49 = vmatpush1.msra.mxu0 %v30
    %50 = vmatprep.subr.mxu0 0.0
    %51 = vmatpush1.msra.mxu0 %v31
    %52 = vmatprep.subr.mxu0 0.0
    %53 = vmatpush1.msra.mxu0 %v32
    %54 = vmatprep.subr.mxu0 0.0
    %55 = vmatpush1.msra.mxu0 %v33
    %56 = vmatprep.subr.mxu0 0.0
    %57 = vmatpush1.msra.mxu0 0.0
    %58 = vmatprep.subr.mxu0 0.0
    %59 = vmatpush1.msra.mxu0 0.0
    %60 = vmatprep.subr.mxu0 0.0
    %61 = vmatpush1.msra.mxu0 0.0
    %62 = vmatprep.subr.mxu0 0.0
    %63 = vmatpush1.msra.mxu0 0.0
    %64 = vmatprep.subr.mxu0 0.0
    %65 = vmatpush1.msra.mxu0 0.0
    %66 = vmatprep.subr.mxu0 0.0
    %67 = vmatpush1.msra.mxu0 0.0
    %68 = vmatprep.subr.mxu0 0.0
    %69 = vmatpush1.msra.mxu0 0.0
    %70 = vmatprep.subr.mxu0 0.0
    %71 = vmatpush1.msra.mxu0 0.0
    %72 = vmatprep.subr.mxu0 0.0
    %73 = vmatpush1.msra.mxu0 0.0
    %74 = vmatprep.subr.mxu0 0.0
    %75 = vmatpush1.msra.mxu0 0.0
    %76 = vmatprep.subr.mxu0 0.0
    %77 = vmatpush1.msra.mxu0 0.0
    %78 = vmatprep.subr.mxu0 0.0
    %79 = vmatpush1.msra.mxu0 0.0
    %80 = vmatprep.subr.mxu0 0.0
    %81 = vmatpush1.msra.mxu0 0.0
    %82 = vmatprep.subr.mxu0 0.0
    %83 = vmatpush1.msra.mxu0 0.0
    %84 = vmatprep.subr.mxu0 0.0
    %85 = vmatpush1.msra.mxu0 0.0
    %86 = vmatprep.subr.mxu0 0.0
    %87 = vmatpush1.msra.mxu0 0.0
    %88 = vmatprep.subr.mxu0 0.0
    %89 = vmatpush1.msra.mxu0 0.0
    %90 = vmatprep.subr.mxu0 0.0
    %91 = vmatpush1.msra.mxu0 0.0
    %92 = vmatprep.subr.mxu0 0.0
    %93 = vmatpush1.msra.mxu0 0.0
    %94 = vmatprep.subr.mxu0 0.0
    %95 = vmatpush1.msra.mxu0 0.0
    %96 = vmatprep.subr.mxu0 0.0
    %97 = vmatpush1.msra.mxu0 0.0
    %98 = vmatprep.subr.mxu0 0.0
    %99 = vmatpush1.msra.mxu0 0.0
    %100 = vmatprep.subr.mxu0 0.0
    %101 = vmatpush1.msra.mxu0 0.0
    %102 = vmatprep.subr.mxu0 0.0
    %103 = vmatpush1.msra.mxu0 0.0
    %104 = vmatprep.subr.mxu0 0.0
    %105 = vmatpush1.msra.mxu0 0.0
    %106 = vmatprep.subr.mxu0 0.0
    %107 = vmatpush1.msra.mxu0 0.0
    %108 = vmatprep.subr.mxu0 0.0
    %109 = vmatpush1.msra.mxu0 0.0
    %110 = vmatprep.subr.mxu0 0.0
    %111 = vmatpush1.msra.mxu0 0.0
    %112 = vmatprep.mubr.f32.mxu0 0.0
    %113 = vmatmul.mubr.f32.gmra.mrb[0].mxu0 %v43
    %v114 = vpop.f32.mrb[0].mxu0
    %v115 = vadd.f32 %v39, %v114
    %v116 = vpop.f32.mrb[0].mxu0
    %117 = vmatprep.mubr.f32.mxu0 0.0
    %118 = vmatmul.mubr.f32.gmra.mrb[0].mxu0 %v46
    %v119 = vpop.f32.mrb[0].mxu0
    %v120 = vadd.f32 %v39, %v119
    %v121 = vpop.f32.mrb[0].mxu0
    %122 = vdwg.mxu0
    %v123 = vmul.f32 %v115, 0.5
    %v124 = vmul.f32 %v120, 0.5
    %v125 = vmul.f32 %v115, 0.7978846
    %v126 = vmul.f32 %v120, 0.7978846
    %v127 = vmul.f32 %v115, 0.044715
    %v128 = vmul.f32 %v120, 0.044715
    %v129 = vmul.f32 %v127, %v115
    %v130 = vmul.f32 %v128, %v120
    %v131 = vadd.f32 %v129, 1.0
    %v132 = vadd.f32 %v130, 1.0
    %v133 = vmul.f32 %v125, %v131
    %v134 = vmul.f32 %v126, %v132
    %v135 = vtanh.pop %v133
    %v136 = vtanh.pop %v134
    %v137 = vadd.f32 %v135, 1.0
    %v138 = vadd.f32 %v136, 1.0
    %v139 = vmul.f32 %v123, %v137
    %v140 = vmul.f32 %v124, %v138
    %v141 = vld [vmem:[#allocation2] sm:$0xff]
    %v142 = vld [vmem:[#allocation2 + $0x8] sm:$0xff]
    %v143 = vld [vmem:[%s3] sm:$0xff]
    %v144 = vld [vmem:[%s3 + $0x8] sm:$0xff]
    %v145 = vld [vmem:[%s3 + $0x10] sm:$0xff]
    %v146 = vld [vmem:[%s3 + $0x18] sm:$0xff]
    %v147 = vld [vmem:[%s3 + $0x20] sm:$0xff]
    %v148 = vld [vmem:[%s3 + $0x28] sm:$0xff]
    %v149 = vld [vmem:[%s3 + $0x30] sm:$0xff]
    %v150 = vld [vmem:[%s3 + $0x38] sm:$0xff]
    %v151 = vld [vmem:[%s3 + $0x40] sm:$0xff]
    %v152 = vld [vmem:[%s3 + $0x48] sm:$0xff]
    %v153 = vld [vmem:[%s3 + $0x50] sm:$0xff]
    %v154 = vld [vmem:[%s3 + $0x58] sm:$0xff]
    %v155 = vld [vmem:[%s3 + $0x60] sm:$0xff]
    %v156 = vld [vmem:[%s3 + $0x68] sm:$0xff]
    %v157 = vld [vmem:[%s3 + $0x70] sm:$0xff]
    %v158 = vld [vmem:[%s3 + $0x78] sm:$0xff]
    %159 = vmatprep.subr.mxu0 0.0
    %160 = vmatpush1.msra.mxu0 %v143
    %161 = vmatprep.subr.mxu0 0.0
    %162 = vmatpush1.msra.mxu0 %v144
    %163 = vmatprep.subr.mxu0 0.0
    %164 = vmatpush1.msra.mxu0 %v145
    %165 = vmatprep.subr.mxu0 0.0
    %166 = vmatpush1.msra.mxu0 %v146
    %167 = vmatprep.subr.mxu0 0.0
    %168 = vmatpush1.msra.mxu0 %v147
    %169 = vmatprep.subr.mxu0 0.0
    %170 = vmatpush1.msra.mxu0 %v148
    %171 = vmatprep.subr.mxu0 0.0
    %172 = vmatpush1.msra.mxu0 %v149
    %173 = vmatprep.subr.mxu0 0.0
    %174 = vmatpush1.msra.mxu0 %v150
    %175 = vmatprep.subr.mxu0 0.0
    %176 = vmatpush1.msra.mxu0 %v151
    %177 = vmatprep.subr.mxu0 0.0
    %178 = vmatpush1.msra.mxu0 %v152
    %179 = vmatprep.subr.mxu0 0.0
    %180 = vmatpush1.msra.mxu0 %v153
    %181 = vmatprep.subr.mxu0 0.0
    %182 = vmatpush1.msra.mxu0 %v154
    %183 = vmatprep.subr.mxu0 0.0
    %184 = vmatpush1.msra.mxu0 %v155
    %185 = vmatprep.subr.mxu0 0.0
    %186 = vmatpush1.msra.mxu0 %v156
    %187 = vmatprep.subr.mxu0 0.0
    %188 = vmatpush1.msra.mxu0 %v157
    %189 = vmatprep.subr.mxu0 0.0
    %190 = vmatpush1.msra.mxu0 %v158
    %191 = vmatprep.subr.mxu0 0.0
    %192 = vmatpush1.msra.mxu0 0.0
    %193 = vmatprep.subr.mxu0 0.0
    %194 = vmatpush1.msra.mxu0 0.0
    %195 = vmatprep.subr.mxu0 0.0
    %196 = vmatpush1.msra.mxu0 0.0
    %197 = vmatprep.subr.mxu0 0.0
    %198 = vmatpush1.msra.mxu0 0.0
    %199 = vmatprep.subr.mxu0 0.0
    %200 = vmatpush1.msra.mxu0 0.0
    %201 = vmatprep.subr.mxu0 0.0
    %202 = vmatpush1.msra.mxu0 0.0
    %203 = vmatprep.subr.mxu0 0.0
    %204 = vmatpush1.msra.mxu0 0.0
    %205 = vmatprep.subr.mxu0 0.0
    %206 = vmatpush1.msra.mxu0 0.0
    %207 = vmatprep.subr.mxu0 0.0
    %208 = vmatpush1.msra.mxu0 0.0
    %209 = vmatprep.subr.mxu0 0.0
    %210 = vmatpush1.msra.mxu0 0.0
    %211 = vmatprep.subr.mxu0 0.0
    %212 = vmatpush1.msra.mxu0 0.0
    %213 = vmatprep.subr.mxu0 0.0
    %214 = vmatpush1.msra.mxu0 0.0
    %215 = vmatprep.subr.mxu0 0.0
    %216 = vmatpush1.msra.mxu0 0.0
    %217 = vmatprep.subr.mxu0 0.0
    %218 = vmatpush1.msra.mxu0 0.0
    %219 = vmatprep.subr.mxu0 0.0
    %220 = vmatpush1.msra.mxu0 0.0
    %221 = vmatprep.subr.mxu0 0.0
    %222 = vmatpush1.msra.mxu0 0.0
    %223 = vmatprep.mubr.f32.mxu0 0.0
    %224 = vmatmul.mubr.f32.gmra.mrb[0].mxu0 %v139
    %v225 = vpop.f32.mrb[0].mxu0
    %v226 = vadd.f32 0.0, %v225
    %v227 = vpop.f32.mrb[0].mxu0
    %228 = vmatprep.mubr.f32.mxu0 0.0
    %229 = vmatmul.mubr.f32.gmra.mrb[0].mxu0 %v140
    %v230 = vpop.f32.mrb[0].mxu0
    %v231 = vadd.f32 0.0, %v230
    %v232 = vpop.f32.mrb[0].mxu0
    %233 = vdwg.mxu0
    %v234 = vadd.f32 %v141, %v226
    %v235 = vadd.f32 %v142, %v231
    %236 = vst.msk [vmem:[#allocation2] sm:$0xff] %vm41, %v234
    %237 = vst.msk [vmem:[#allocation2 + $0x8] sm:$0xff] %vm41, %v235
    // Predicated region
    $region26: #{mlp_forward.1} parent=1 // pred_check
      %p238 = pneg %p21
    $region27: #{mlp_forward.1} parent=1 // pred_check_branch
      %240 = sbr.rel (%p238) target = $region29
    $region28: #{mlp_forward.1} parent=1 // pred_region
      %v241 = vld [vmem:[#allocation2] sm:$0xff]
      %v242 = vld [vmem:[#allocation2 + $0x8] sm:$0xff]
      %v243 = vld [vmem:[%s4] sm:$0x1]
      %v245 = vlaneseq
      %v246 = vshrl.u32 %v245, 7
      %v247 = vsub.s32 0, %v246
      %v248 = vrot.slane %v243, %v247
      %v250 = vadd.f32 %v241, %v248
      %v251 = vadd.f32 %v242, %v248
      %252 = vst.msk [vmem:[#allocation3] sm:$0xff] %vm41, %v250
      %253 = vst.msk [vmem:[#allocation3 + $0x8] sm:$0xff] %vm41, %v251
    $region29: #{mlp_forward.1} parent=1 // pred_fallthru
      _
    // Predicated region
    $region30: #{mlp_forward.1} parent=1 // pred_check
      _
    $region31: #{mlp_forward.1} parent=1 // pred_check_branch
      %255 = sbr.rel (0) target = $region33
    $region32: #{mlp_forward.1} parent=1 // pred_region
      %s257 = ssub.s32 256, 256
      %258 = vsyncadd [#allocation4], %s257
      %s259 = sshll.u32 [#allocation3], 4
      %s260 = int_to_ptr.vmem [resolvable:$true] %s259
      %265 = dma.vmem_to_hbm [thread:$0]  %s260, 256, %s5, [#allocation4], 128, 128, 8
    $region33: #{mlp_forward.1} parent=1 // pred_fallthru
      _
    // Predicated region
    $region34: #{mlp_forward.1} parent=1 // pred_check
      _
    $region35: #{mlp_forward.1} parent=1 // pred_check_branch
      %267 = sbr.rel (0) target = $region37
    $region36: #{mlp_forward.1} parent=1 // pred_region
      %268 = dma.done [#allocation4], 256
    $region37: #{mlp_forward.1} parent=1 // pred_fallthru
      _
    %269 = vsyncpa [#allocation4], 1

</llo_original>
